<compile_context>
chip_gen: v6e
topology: v6e:2x2x1
jax: 0.10.0
libtpu: 0.0.40
codegen_flags: <defaults>
</compile_context>

<pallas_src>
import jax
import jax.numpy as jnp
from jax.experimental import pallas as pl
from jax.experimental.pallas import tpu as pltpu

LATENT_DIM = 32          # opt.latent_dim
CLIP_DIM = 512           # opt.clip_version == 'ViT-B/32'
VAE_DIM = 8
LN_EPS = 1e-5

MAX_TOKEN_TILE = 2048    # tokens (lanes) per grid step of the fused kernel
MAX_WORD_TILE = 512      # rows per grid step of the word_emb linear


def _round_up(x, m):
    return ((x + m - 1) // m) * m


# ----------------------------------------------------------------------------
# Fused Denoiser kernel (feature-major layout: features on sublanes, tokens on lanes)
#   InputProcess: Linear -> ReLU -> Linear
#   + positional embedding (dropout is an eval-mode no-op)
#   + OutputProcess: LayerNorm (f32) -> Linear -> ReLU -> Linear
# ----------------------------------------------------------------------------
def _fused_denoiser_kernel(x_ref, pe_ref,
                           ipw1_ref, ipb1_ref, ipw2_ref, ipb2_ref,
                           g_ref, bt_ref,
                           opw1_ref, opb1_ref, opw2_ref, opb2_ref,
                           o_ref):
    x = x_ref[...]                                                   # (VAE_DIM, tm)

    # InputProcess: Linear -> ReLU -> Linear   (weights are pre-transposed: W^T @ x)
    h = jnp.dot(ipw1_ref[...], x, preferred_element_type=jnp.float32) + ipb1_ref[...]
    h = jnp.maximum(h, 0.0)                                          # (D, tm)
    z = jnp.dot(ipw2_ref[...], h, preferred_element_type=jnp.float32) + ipb2_ref[...]

    # positional embedding add
    z = z + pe_ref[...]                                              # (D, tm)

    # OutputProcess: LayerNorm (f32, over the feature/sublane axis) -> Linear -> ReLU -> Linear
    mu = jnp.mean(z, axis=0, keepdims=True)                          # (1, tm)
    var = jnp.mean(jnp.square(z - mu), axis=0, keepdims=True)
    zn = (z - mu) * jax.lax.rsqrt(var + LN_EPS)
    zn = zn * g_ref[...] + bt_ref[...]
    h2 = jnp.dot(opw1_ref[...], zn, preferred_element_type=jnp.float32) + opb1_ref[...]
    h2 = jnp.maximum(h2, 0.0)
    out = jnp.dot(opw2_ref[...], h2, preferred_element_type=jnp.float32) + opb2_ref[...]

    o_ref[...] = out.astype(o_ref.dtype)                             # (VAE_DIM, tm) lane-dense


def fused_denoiser_tokens(x2d, pe2d_t, params):
    """x2d: [N, VAE_DIM] tokens; pe2d_t: [D, N] positional embeddings (feature-major).
    Returns [N, VAE_DIM]."""
    n, fin = x2d.shape
    d = LATENT_DIM

    tm = min(MAX_TOKEN_TILE, _round_up(n, 128))      # lane tile (multiple of 128)
    n_pad = _round_up(n, tm)

    x_t = x2d.T                                      # (VAE_DIM, N) — layout plumbing in XLA
    if n_pad != n:
        x_t = jnp.pad(x_t, ((0, 0), (0, n_pad - n)))
        pe2d_t = jnp.pad(pe2d_t, ((0, 0), (0, n_pad - n)))

    out_t = pl.pallas_call(
        _fused_denoiser_kernel,
        out_shape=jax.ShapeDtypeStruct((fin, n_pad), x2d.dtype),
        grid=(n_pad // tm,),
        in_specs=[
            pl.BlockSpec((fin, tm), lambda i: (0, i)),   # x (feature-major)
            pl.BlockSpec((d, tm), lambda i: (0, i)),     # positional embedding slab
            pl.BlockSpec((d, fin), lambda i: (0, 0)),    # ip_w1^T
            pl.BlockSpec((d, 1), lambda i: (0, 0)),      # ip_b1^T
            pl.BlockSpec((d, d), lambda i: (0, 0)),      # ip_w2^T
            pl.BlockSpec((d, 1), lambda i: (0, 0)),      # ip_b2^T
            pl.BlockSpec((d, 1), lambda i: (0, 0)),      # ln gamma
            pl.BlockSpec((d, 1), lambda i: (0, 0)),      # ln beta
            pl.BlockSpec((d, d), lambda i: (0, 0)),      # op_w1^T
            pl.BlockSpec((d, 1), lambda i: (0, 0)),      # op_b1^T
            pl.BlockSpec((fin, d), lambda i: (0, 0)),    # op_w2^T
            pl.BlockSpec((fin, 1), lambda i: (0, 0)),    # op_b2^T
        ],
        out_specs=pl.BlockSpec((fin, tm), lambda i: (0, i)),
        compiler_params=pltpu.CompilerParams(dimension_semantics=("parallel",)),
    )(x_t, pe2d_t,
      params["ip_w1"].T, params["ip_b1"].T, params["ip_w2"].T, params["ip_b2"].T,
      params["op_gamma"].T, params["op_beta"].T,
      params["op_w1"].T, params["op_b1"].T, params["op_w2"].T, params["op_b2"].T)

    return out_t[:, :n].T                             # back to [N, VAE_DIM]


# ----------------------------------------------------------------------------
# word_emb: single Linear (clip_dim -> latent_dim) on the CLIP text features.
# Row layout is kept here: loads are already 512-lane dense and the 32-wide output
# is only 1/16 of the traffic (and is currently consumed only by the transformer stub).
# ----------------------------------------------------------------------------
def _linear_kernel(x_ref, w_ref, b_ref, o_ref):
    o_ref[...] = (jnp.dot(x_ref[...], w_ref[...], preferred_element_type=jnp.float32)
                  + b_ref[...]).astype(o_ref.dtype)


def word_emb_linear(x, w, b):
    n, fin = x.shape
    d = w.shape[1]
    tm = min(MAX_WORD_TILE, _round_up(n, 8))
    n_pad = _round_up(n, tm)
    if n_pad != n:
        x = jnp.pad(x, ((0, n_pad - n), (0, 0)))
    out = pl.pallas_call(
        _linear_kernel,
        out_shape=jax.ShapeDtypeStruct((n_pad, d), x.dtype),
        grid=(n_pad // tm,),
        in_specs=[
            pl.BlockSpec((tm, fin), lambda i: (i, 0)),
            pl.BlockSpec((fin, d), lambda i: (0, 0)),
            pl.BlockSpec((1, d), lambda i: (0, 0)),
        ],
        out_specs=pl.BlockSpec((tm, d), lambda i: (i, 0)),
        compiler_params=pltpu.CompilerParams(dimension_semantics=("parallel",)),
    )(x, w, b)
    return out[:n]


# ----------------------------------------------------------------------------
# Glue (plain JAX): parameters, sinusoidal embeddings, reshapes
# ----------------------------------------------------------------------------
def sinusoidal_embedding(pos, dim):
    """pos: [N] float -> [N, dim] sin/cos embedding (standard transformer PE)."""
    half = dim // 2
    freqs = jnp.exp(-jnp.log(10000.0) * jnp.arange(half, dtype=jnp.float32) / half)
    args = pos[:, None].astype(jnp.float32) * freqs[None, :]
    return jnp.concatenate([jnp.sin(args), jnp.cos(args)], axis=-1)


def init_params(key):
    def dense(k, fin, fout, scale=0.02):
        kw, _ = jax.random.split(k)
        return (scale * jax.random.normal(kw, (fin, fout), jnp.float32),
                jnp.zeros((1, fout), jnp.float32))

    keys = jax.random.split(key, 8)
    p = {}
    # InputProcess: Linear(vae_dim, D) -> ReLU -> Linear(D, D)
    p["ip_w1"], p["ip_b1"] = dense(keys[0], VAE_DIM, LATENT_DIM)
    p["ip_w2"], p["ip_b2"] = dense(keys[1], LATENT_DIM, LATENT_DIM)
    # word_emb: Linear(clip_dim, D)
    p["we_w"], p["we_b"] = dense(keys[2], CLIP_DIM, LATENT_DIM)
    # TimestepEmbedding projection (definition not provided; sinusoidal + Linear)
    p["ts_w"], p["ts_b"] = dense(keys[3], LATENT_DIM, LATENT_DIM)
    # OutputProcess: LayerNorm(D) -> Linear(D, D) -> ReLU -> Linear(D, vae_dim)
    p["op_gamma"] = jnp.ones((1, LATENT_DIM), jnp.float32)
    p["op_beta"] = jnp.zeros((1, LATENT_DIM), jnp.float32)
    p["op_w1"], p["op_b1"] = dense(keys[4], LATENT_DIM, LATENT_DIM)
    p["op_w2"], p["op_b2"] = dense(keys[5], LATENT_DIM, VAE_DIM)
    return p


def denoiser_forward(params, x, timestep, text_feats, ca_mask, len_mask=None):
    """x: [B, T, J, vae_dim]; timestep: [1]; text_feats: [B, n_tok, clip_dim];
    ca_mask: [B, n_tok] bool. Returns (out [B, T, J, vae_dim], attn_weights)."""
    B, T, J, Fin = x.shape
    D = LATENT_DIM
    N = B * T * J

    # ---- fused InputProcess -> +pos_emb -> OutputProcess (single Pallas call) ----
    # TODO(synk): the fusion across the transformer is valid only while SkipTransformer
    # (not provided) is an identity stub; when it lands, split the kernel at that point
    # (keeping the PE add fused into InputProcess' epilogue).
    pe = sinusoidal_embedding(jnp.arange(T * J, dtype=jnp.float32), D)   # [T*J, D]
    pe_t = jnp.tile(pe.T, (1, B))                                        # [D, B*T*J]
    out2d = fused_denoiser_tokens(x.reshape(N, Fin), pe_t, params)       # [N, vae_dim]
    out = out2d.reshape(B, T, J, Fin)

    # ---- timestep embedding (sinusoidal + linear, then .expand(B, D)) ----
    # TODO(synk): TimestepEmbedding definition not provided; using sinusoidal + Linear.
    t_sin = sinusoidal_embedding(timestep.astype(jnp.float32), D)        # [1, D]
    t_emb = t_sin @ params["ts_w"] + params["ts_b"]                      # [1, D]
    t_emb = jnp.broadcast_to(t_emb, (B, D))                              # expand(B, D)

    # ---- word embedding of (pre-encoded) CLIP text features (Pallas linear) ----
    # TODO(synk): FrozenCLIPTextEncoder not provided; text_feats stands in for encode_text
    # output.  word_emb/t_emb are dead under the identity-transformer stub below; they are
    # kept so the path is ready (and cheap: one pallas_call, single grid step at these sizes).
    n_tok = text_feats.shape[1]
    word_emb = word_emb_linear(text_feats.reshape(B * n_tok, CLIP_DIM),
                               params["we_w"], params["we_b"]).reshape(B, n_tok, D)

    # ---- transformer ----
    # TODO(synk): SkipTransformer definition not provided; treated as identity (t_emb,
    # word_emb, ~ca_mask, len_mask unused), attn_weights = None.
    del t_emb, word_emb, ca_mask, len_mask
    attn_weights = None

    return out, attn_weights


if __name__ == "__main__":
    key = jax.random.PRNGKey(0)
    k_param, k_x, k_txt = jax.random.split(key, 3)

    B, T, J = 2, 4, 2
    n_tok = 8

    params = init_params(k_param)
    x = jax.random.normal(k_x, (B, T, J, VAE_DIM), jnp.float32)
    timestep = jnp.array([17], jnp.int32)
    text_feats = jax.random.normal(k_txt, (B, n_tok, CLIP_DIM), jnp.float32)
    ca_mask = jnp.ones((B, n_tok), jnp.bool_)

    fwd = jax.jit(denoiser_forward)
    out, attn = fwd(params, x, timestep, text_feats, ca_mask)
    jax.block_until_ready(out)
    assert out.shape == (B, T, J, VAE_DIM)
    print("KERNEL_OK")
</pallas_src>

<mosaic_0001>
module attributes {stable_mosaic.version = 11 : i64} {
  func.func @_fused_denoiser_kernel(%arg0: i32, %arg1: memref<8x128xf32, #tpu.memory_space<vmem>>, %arg2: memref<32x128xf32, #tpu.memory_space<vmem>>, %arg3: memref<32x8xf32, #tpu.memory_space<vmem>>, %arg4: memref<32x1xf32, #tpu.memory_space<vmem>>, %arg5: memref<32x32xf32, #tpu.memory_space<vmem>>, %arg6: memref<32x1xf32, #tpu.memory_space<vmem>>, %arg7: memref<32x1xf32, #tpu.memory_space<vmem>>, %arg8: memref<32x1xf32, #tpu.memory_space<vmem>>, %arg9: memref<32x32xf32, #tpu.memory_space<vmem>>, %arg10: memref<32x1xf32, #tpu.memory_space<vmem>>, %arg11: memref<8x32xf32, #tpu.memory_space<vmem>>, %arg12: memref<8x1xf32, #tpu.memory_space<vmem>>, %arg13: memref<8x128xf32, #tpu.memory_space<vmem>>) attributes {dimension_semantics = [#tpu.dimension_semantics<parallel>], iteration_bounds = array<i64: 1>, scalar_prefetch = 0 : i64, scratch_operands = 0 : i64, tpu.core_type = #tpu.core_type<tc>, window_params = [{transform_indices = @transform_0, window_bounds = array<i64: 8, 128>}, {transform_indices = @transform_1, window_bounds = array<i64: 32, 128>}, {pipeline_mode = #tpu.pipeline_mode<synchronous>, transform_indices = @transform_2, window_bounds = array<i64: 32, 8>}, {pipeline_mode = #tpu.pipeline_mode<synchronous>, transform_indices = @transform_3, window_bounds = array<i64: 32, 1>}, {pipeline_mode = #tpu.pipeline_mode<synchronous>, transform_indices = @transform_4, window_bounds = array<i64: 32, 32>}, {pipeline_mode = #tpu.pipeline_mode<synchronous>, transform_indices = @transform_5, window_bounds = array<i64: 32, 1>}, {pipeline_mode = #tpu.pipeline_mode<synchronous>, transform_indices = @transform_6, window_bounds = array<i64: 32, 1>}, {pipeline_mode = #tpu.pipeline_mode<synchronous>, transform_indices = @transform_7, window_bounds = array<i64: 32, 1>}, {pipeline_mode = #tpu.pipeline_mode<synchronous>, transform_indices = @transform_8, window_bounds = array<i64: 32, 32>}, {pipeline_mode = #tpu.pipeline_mode<synchronous>, transform_indices = @transform_9, window_bounds = array<i64: 32, 1>}, {pipeline_mode = #tpu.pipeline_mode<synchronous>, transform_indices = @transform_10, window_bounds = array<i64: 8, 32>}, {pipeline_mode = #tpu.pipeline_mode<synchronous>, transform_indices = @transform_11, window_bounds = array<i64: 8, 1>}, {transform_indices = @transform_12, window_bounds = array<i64: 8, 128>}]} {
    %c0 = arith.constant 0 : index
    %c0_0 = arith.constant 0 : index
    %0 = vector.load %arg1[%c0, %c0_0] : memref<8x128xf32, #tpu.memory_space<vmem>>, vector<8x128xf32>
    %c0_1 = arith.constant 0 : index
    %c0_2 = arith.constant 0 : index
    %1 = vector.load %arg3[%c0_1, %c0_2] : memref<32x8xf32, #tpu.memory_space<vmem>>, vector<32x8xf32>
    %cst = arith.constant dense<0.000000e+00> : vector<32x128xf32>
    %2 = tpu.matmul %1, %0, %cst {dimension_numbers = #tpu.dot_dimension_numbers<[1], [0], [0], [1], [0, 0, 1, 1], [], []>} : vector<32x8xf32>, vector<8x128xf32>, vector<32x128xf32> -> vector<32x128xf32>
    %c0_3 = arith.constant 0 : index
    %c0_4 = arith.constant 0 : index
    %3 = vector.load %arg4[%c0_3, %c0_4] : memref<32x1xf32, #tpu.memory_space<vmem>>, vector<32x1xf32>
    %4 = vector.broadcast %3 : vector<32x1xf32> to vector<32x128xf32>
    %5 = arith.addf %2, %4 : vector<32x128xf32>
    %cst_5 = arith.constant 0.000000e+00 : f32
    %6 = vector.broadcast %cst_5 : f32 to vector<32x128xf32>
    %7 = arith.maximumf %5, %6 : vector<32x128xf32>
    %c0_6 = arith.constant 0 : index
    %c0_7 = arith.constant 0 : index
    %8 = vector.load %arg5[%c0_6, %c0_7] : memref<32x32xf32, #tpu.memory_space<vmem>>, vector<32x32xf32>
    %cst_8 = arith.constant dense<0.000000e+00> : vector<32x128xf32>
    %9 = tpu.matmul %8, %7, %cst_8 {dimension_numbers = #tpu.dot_dimension_numbers<[1], [0], [0], [1], [0, 0, 1, 1], [], []>} : vector<32x32xf32>, vector<32x128xf32>, vector<32x128xf32> -> vector<32x128xf32>
    %c0_9 = arith.constant 0 : index
    %c0_10 = arith.constant 0 : index
    %10 = vector.load %arg6[%c0_9, %c0_10] : memref<32x1xf32, #tpu.memory_space<vmem>>, vector<32x1xf32>
    %11 = vector.broadcast %10 : vector<32x1xf32> to vector<32x128xf32>
    %12 = arith.addf %9, %11 : vector<32x128xf32>
    %c0_11 = arith.constant 0 : index
    %c0_12 = arith.constant 0 : index
    %13 = vector.load %arg2[%c0_11, %c0_12] : memref<32x128xf32, #tpu.memory_space<vmem>>, vector<32x128xf32>
    %14 = arith.addf %12, %13 : vector<32x128xf32>
    %cst_13 = arith.constant dense<0.000000e+00> : vector<128xf32>
    %15 = vector.multi_reduction <add>, %14, %cst_13 [0] : vector<32x128xf32> to vector<128xf32>
    %16 = vector.shape_cast %15 : vector<128xf32> to vector<1x128xf32>
    %cst_14 = arith.constant 3.200000e+01 : f32
    %17 = vector.broadcast %cst_14 : f32 to vector<1x128xf32>
    %18 = arith.divf %16, %17 : vector<1x128xf32>
    %19 = vector.broadcast %18 : vector<1x128xf32> to vector<32x128xf32>
    %20 = arith.subf %14, %19 : vector<32x128xf32>
    %21 = arith.mulf %20, %20 : vector<32x128xf32>
    %cst_15 = arith.constant dense<0.000000e+00> : vector<128xf32>
    %22 = vector.multi_reduction <add>, %21, %cst_15 [0] : vector<32x128xf32> to vector<128xf32>
    %23 = vector.shape_cast %22 : vector<128xf32> to vector<1x128xf32>
    %cst_16 = arith.constant 3.200000e+01 : f32
    %24 = vector.broadcast %cst_16 : f32 to vector<1x128xf32>
    %25 = arith.divf %23, %24 : vector<1x128xf32>
    %26 = vector.broadcast %18 : vector<1x128xf32> to vector<32x128xf32>
    %27 = arith.subf %14, %26 : vector<32x128xf32>
    %cst_17 = arith.constant 9.99999974E-6 : f32
    %28 = vector.broadcast %cst_17 : f32 to vector<1x128xf32>
    %29 = arith.addf %25, %28 : vector<1x128xf32>
    %30 = math.rsqrt %29 : vector<1x128xf32>
    %31 = vector.broadcast %30 : vector<1x128xf32> to vector<32x128xf32>
    %32 = arith.mulf %27, %31 : vector<32x128xf32>
    %c0_18 = arith.constant 0 : index
    %c0_19 = arith.constant 0 : index
    %33 = vector.load %arg7[%c0_18, %c0_19] : memref<32x1xf32, #tpu.memory_space<vmem>>, vector<32x1xf32>
    %34 = vector.broadcast %33 : vector<32x1xf32> to vector<32x128xf32>
    %35 = arith.mulf %32, %34 : vector<32x128xf32>
    %c0_20 = arith.constant 0 : index
    %c0_21 = arith.constant 0 : index
    %36 = vector.load %arg8[%c0_20, %c0_21] : memref<32x1xf32, #tpu.memory_space<vmem>>, vector<32x1xf32>
    %37 = vector.broadcast %36 : vector<32x1xf32> to vector<32x128xf32>
    %38 = arith.addf %35, %37 : vector<32x128xf32>
    %c0_22 = arith.constant 0 : index
    %c0_23 = arith.constant 0 : index
    %39 = vector.load %arg9[%c0_22, %c0_23] : memref<32x32xf32, #tpu.memory_space<vmem>>, vector<32x32xf32>
    %cst_24 = arith.constant dense<0.000000e+00> : vector<32x128xf32>
    %40 = tpu.matmul %39, %38, %cst_24 {dimension_numbers = #tpu.dot_dimension_numbers<[1], [0], [0], [1], [0, 0, 1, 1], [], []>} : vector<32x32xf32>, vector<32x128xf32>, vector<32x128xf32> -> vector<32x128xf32>
    %c0_25 = arith.constant 0 : index
    %c0_26 = arith.constant 0 : index
    %41 = vector.load %arg10[%c0_25, %c0_26] : memref<32x1xf32, #tpu.memory_space<vmem>>, vector<32x1xf32>
    %42 = vector.broadcast %41 : vector<32x1xf32> to vector<32x128xf32>
    %43 = arith.addf %40, %42 : vector<32x128xf32>
    %cst_27 = arith.constant 0.000000e+00 : f32
    %44 = vector.broadcast %cst_27 : f32 to vector<32x128xf32>
    %45 = arith.maximumf %43, %44 : vector<32x128xf32>
    %c0_28 = arith.constant 0 : index
    %c0_29 = arith.constant 0 : index
    %46 = vector.load %arg11[%c0_28, %c0_29] : memref<8x32xf32, #tpu.memory_space<vmem>>, vector<8x32xf32>
    %cst_30 = arith.constant dense<0.000000e+00> : vector<8x128xf32>
    %47 = tpu.matmul %46, %45, %cst_30 {dimension_numbers = #tpu.dot_dimension_numbers<[1], [0], [0], [1], [0, 0, 1, 1], [], []>} : vector<8x32xf32>, vector<32x128xf32>, vector<8x128xf32> -> vector<8x128xf32>
    %c0_31 = arith.constant 0 : index
    %c0_32 = arith.constant 0 : index
    %48 = vector.load %arg12[%c0_31, %c0_32] : memref<8x1xf32, #tpu.memory_space<vmem>>, vector<8x1xf32>
    %49 = vector.broadcast %48 : vector<8x1xf32> to vector<8x128xf32>
    %50 = arith.addf %47, %49 : vector<8x128xf32>
    %c0_33 = arith.constant 0 : index
    %c0_34 = arith.constant 0 : index
    %51 = vector.load %arg13[%c0_33, %c0_34] : memref<8x128xf32, #tpu.memory_space<vmem>>, vector<8x128xf32>
    tpu.vector_store %arg13[%c0_33, %c0_34], %50 {strides = array<i32>} : memref<8x128xf32, #tpu.memory_space<vmem>>, vector<8x128xf32>,
    return
  }
  func.func @transform_0(%arg0: i32) -> (i32, i32) {
    %c0_i32 = arith.constant 0 : i32
    %c0_i32_0 = arith.constant 0 : i32
    return %c0_i32, %arg0 : i32, i32
  }
  func.func @transform_1(%arg0: i32) -> (i32, i32) {
    %c0_i32 = arith.constant 0 : i32
    %c0_i32_0 = arith.constant 0 : i32
    return %c0_i32, %arg0 : i32, i32
  }
  func.func @transform_2(%arg0: i32) -> (i32, i32) {
    %c0_i32 = arith.constant 0 : i32
    %c0_i32_0 = arith.constant 0 : i32
    %c0_i32_1 = arith.constant 0 : i32
    return %c0_i32, %c0_i32_0 : i32, i32
  }
  func.func @transform_3(%arg0: i32) -> (i32, i32) {
    %c0_i32 = arith.constant 0 : i32
    %c0_i32_0 = arith.constant 0 : i32
    %c0_i32_1 = arith.constant 0 : i32
    return %c0_i32, %c0_i32_0 : i32, i32
  }
  func.func @transform_4(%arg0: i32) -> (i32, i32) {
    %c0_i32 = arith.constant 0 : i32
    %c0_i32_0 = arith.constant 0 : i32
    %c0_i32_1 = arith.constant 0 : i32
    return %c0_i32, %c0_i32_0 : i32, i32
  }
  func.func @transform_5(%arg0: i32) -> (i32, i32) {
    %c0_i32 = arith.constant 0 : i32
    %c0_i32_0 = arith.constant 0 : i32
    %c0_i32_1 = arith.constant 0 : i32
    return %c0_i32, %c0_i32_0 : i32, i32
  }
  func.func @transform_6(%arg0: i32) -> (i32, i32) {
    %c0_i32 = arith.constant 0 : i32
    %c0_i32_0 = arith.constant 0 : i32
    %c0_i32_1 = arith.constant 0 : i32
    return %c0_i32, %c0_i32_0 : i32, i32
  }
  func.func @transform_7(%arg0: i32) -> (i32, i32) {
    %c0_i32 = arith.constant 0 : i32
    %c0_i32_0 = arith.constant 0 : i32
    %c0_i32_1 = arith.constant 0 : i32
    return %c0_i32, %c0_i32_0 : i32, i32
  }
  func.func @transform_8(%arg0: i32) -> (i32, i32) {
    %c0_i32 = arith.constant 0 : i32
    %c0_i32_0 = arith.constant 0 : i32
    %c0_i32_1 = arith.constant 0 : i32
    return %c0_i32, %c0_i32_0 : i32, i32
  }
  func.func @transform_9(%arg0: i32) -> (i32, i32) {
    %c0_i32 = arith.constant 0 : i32
    %c0_i32_0 = arith.constant 0 : i32
    %c0_i32_1 = arith.constant 0 : i32
    return %c0_i32, %c0_i32_0 : i32, i32
  }
  func.func @transform_10(%arg0: i32) -> (i32, i32) {
    %c0_i32 = arith.constant 0 : i32
    %c0_i32_0 = arith.constant 0 : i32
    %c0_i32_1 = arith.constant 0 : i32
    return %c0_i32, %c0_i32_0 : i32, i32
  }
  func.func @transform_11(%arg0: i32) -> (i32, i32) {
    %c0_i32 = arith.constant 0 : i32
    %c0_i32_0 = arith.constant 0 : i32
    %c0_i32_1 = arith.constant 0 : i32
    return %c0_i32, %c0_i32_0 : i32, i32
  }
  func.func @transform_12(%arg0: i32) -> (i32, i32) {
    %c0_i32 = arith.constant 0 : i32
    %c0_i32_0 = arith.constant 0 : i32
    return %c0_i32, %arg0 : i32, i32
  }
}

</mosaic_0001>

<llo_original>
// kernel: denoiser_forward.1
$region0: #{denoiser_forward.1}
  #allocation0 [shape = 'u32[]', space=smem, size = 0x4, offset = 0x4, fixed_abs, tag = 'smem constant byte address 0x4 - core index']
  #allocation1 [shape = 'u32[144,128]{1,0:T(1,128)}', space=vmem, size = 0x12000, scoped, tag = 'internal scratch']
  %s0 = inlined_call_operand.vmem [shape: f32[8,128], index: 0, kind: input, shape index: {}]
  %s1 = inlined_call_operand.vmem [shape: f32[32,128], index: 1, kind: input, shape index: {}]
  %s2 = inlined_call_operand.vmem [shape: f32[32,8], index: 2, kind: input, shape index: {}]
  %s3 = inlined_call_operand.vmem [shape: f32[32,1], index: 3, kind: input, shape index: {}]
  %s4 = inlined_call_operand.vmem [shape: f32[32,32], index: 4, kind: input, shape index: {}]
  %s5 = inlined_call_operand.vmem [shape: f32[32,1], index: 5, kind: input, shape index: {}]
  %s6 = inlined_call_operand.vmem [shape: f32[32,1], index: 6, kind: input, shape index: {}]
  %s7 = inlined_call_operand.vmem [shape: f32[32,1], index: 7, kind: input, shape index: {}]
  %s8 = inlined_call_operand.vmem [shape: f32[32,32], index: 8, kind: input, shape index: {}]
  %s9 = inlined_call_operand.vmem [shape: f32[32,1], index: 9, kind: input, shape index: {}]
  %s10 = inlined_call_operand.vmem [shape: f32[8,32], index: 10, kind: input, shape index: {}]
  %s11 = inlined_call_operand.vmem [shape: f32[8,1], index: 11, kind: input, shape index: {}]
  %s12 = inlined_call_operand.vmem [shape: f32[8,128], index: 12, kind: output, shape index: {}]
  %s13 = sld [smem:[#allocation0]]
  $region58: #{denoiser_forward.1} parent=0
    _
  %s15 = ssub.s32 1, %s13
  %s16 = scalar_select 0, %s15, %s13
  // Predicated region
  $region2: #{denoiser_forward.1} parent=0 // pred_check
    _
  $region3: #{denoiser_forward.1} parent=0 // pred_check_branch
    %18 = sbr.rel (0) target = $region5
  $region4: #{denoiser_forward.1} parent=0 // pred_region
    _
  $region5: #{denoiser_forward.1} parent=0 // pred_fallthru
    _
  // Predicated region
  $region6: #{denoiser_forward.1} parent=0 // pred_check
    _
  $region7: #{denoiser_forward.1} parent=0 // pred_check_branch
    %20 = sbr.rel (0) target = $region9
  $region8: #{denoiser_forward.1} parent=0 // pred_region
    _
  $region9: #{denoiser_forward.1} parent=0 // pred_fallthru
    _
  // Predicated region
  $region10: #{denoiser_forward.1} parent=0 // pred_check
    _
  $region11: #{denoiser_forward.1} parent=0 // pred_check_branch
    %22 = sbr.rel (0) target = $region13
  $region12: #{denoiser_forward.1} parent=0 // pred_region
    _
  $region13: #{denoiser_forward.1} parent=0 // pred_fallthru
    _
  // Predicated region
  $region14: #{denoiser_forward.1} parent=0 // pred_check
    _
  $region15: #{denoiser_forward.1} parent=0 // pred_check_branch
    %24 = sbr.rel (0) target = $region17
  $region16: #{denoiser_forward.1} parent=0 // pred_region
    _
  $region17: #{denoiser_forward.1} parent=0 // pred_fallthru
    _
  // Predicated region
  $region18: #{denoiser_forward.1} parent=0 // pred_check
    _
  $region19: #{denoiser_forward.1} parent=0 // pred_check_branch
    %26 = sbr.rel (0) target = $region21
  $region20: #{denoiser_forward.1} parent=0 // pred_region
    _
  $region21: #{denoiser_forward.1} parent=0 // pred_fallthru
    _
  // Predicated region
  $region22: #{denoiser_forward.1} parent=0 // pred_check
    _
  $region23: #{denoiser_forward.1} parent=0 // pred_check_branch
    %28 = sbr.rel (0) target = $region25
  $region24: #{denoiser_forward.1} parent=0 // pred_region
    _
  $region25: #{denoiser_forward.1} parent=0 // pred_fallthru
    _
  // Predicated region
  $region26: #{denoiser_forward.1} parent=0 // pred_check
    _
  $region27: #{denoiser_forward.1} parent=0 // pred_check_branch
    %30 = sbr.rel (0) target = $region29
  $region28: #{denoiser_forward.1} parent=0 // pred_region
    _
  $region29: #{denoiser_forward.1} parent=0 // pred_fallthru
    _
  // Predicated region
  $region30: #{denoiser_forward.1} parent=0 // pred_check
    _
  $region31: #{denoiser_forward.1} parent=0 // pred_check_branch
    %32 = sbr.rel (0) target = $region33
  $region32: #{denoiser_forward.1} parent=0 // pred_region
    _
  $region33: #{denoiser_forward.1} parent=0 // pred_fallthru
    _
  // Predicated region
  $region34: #{denoiser_forward.1} parent=0 // pred_check
    _
  $region35: #{denoiser_forward.1} parent=0 // pred_check_branch
    %34 = sbr.rel (0) target = $region37
  $region36: #{denoiser_forward.1} parent=0 // pred_region
    _
  $region37: #{denoiser_forward.1} parent=0 // pred_fallthru
    _
  // Predicated region
  $region38: #{denoiser_forward.1} parent=0 // pred_check
    _
  $region39: #{denoiser_forward.1} parent=0 // pred_check_branch
    %36 = sbr.rel (0) target = $region41
  $region40: #{denoiser_forward.1} parent=0 // pred_region
    _
  $region41: #{denoiser_forward.1} parent=0 // pred_fallthru
    _
  // Predicated region
  $region42: #{denoiser_forward.1} parent=0 // pred_check
    _
  $region43: #{denoiser_forward.1} parent=0 // pred_check_branch
    %38 = sbr.rel (0) target = $region45
  $region44: #{denoiser_forward.1} parent=0 // pred_region
    _
  $region45: #{denoiser_forward.1} parent=0 // pred_fallthru
    _
  // Predicated region
  $region46: #{denoiser_forward.1} parent=0 // pred_check
    _
  $region47: #{denoiser_forward.1} parent=0 // pred_check_branch
    %40 = sbr.rel (0) target = $region49
  $region48: #{denoiser_forward.1} parent=0 // pred_region
    _
  $region49: #{denoiser_forward.1} parent=0 // pred_fallthru
    _
  %v41 = vld [vmem:[%s0] sm:$0xff]
  %v42 = vld [vmem:[%s2] sm:$0xff]
  %v43 = vld [vmem:[%s2 + $0x8] sm:$0xff]
  %v44 = vld [vmem:[%s2 + $0x10] sm:$0xff]
  %v45 = vld [vmem:[%s2 + $0x18] sm:$0xff]
  %v46 = vld [vmem:[%s3] sm:$0xff]
  %v47 = vld [vmem:[%s3 + $0x8] sm:$0xff]
  %v48 = vld [vmem:[%s3 + $0x10] sm:$0xff]
  %v49 = vld [vmem:[%s3 + $0x18] sm:$0xff]
  %51 = vset.pattern.permute.xlu0 0
  %52 = vperm.xlu0 %51, %v46
  %v53 = vpop.permute.xlu0 %52
  %56 = vset.pattern.permute.xlu0 0
  %57 = vperm.xlu0 %56, %v47
  %v58 = vpop.permute.xlu0 %57
  %61 = vset.pattern.permute.xlu0 0
  %62 = vperm.xlu0 %61, %v48
  %v63 = vpop.permute.xlu0 %62
  %66 = vset.pattern.permute.xlu0 0
  %67 = vperm.xlu0 %66, %v49
  %v68 = vpop.permute.xlu0 %67
  %vm70 = vcmask 64512
  %v72 = vsel %vm70, %v42, 0
  %v75 = vsel %vm70, %v43, 0
  %v78 = vsel %vm70, %v44, 0
  %v81 = vsel %vm70, %v45, 0
  %83 = vmatprep.subr.mxu0 0.0
  %84 = vmatpush1.msra.mxu0 0.0
  %85 = vmatprep.subr.mxu0 0.0
  %86 = vmatpush1.msra.mxu0 0.0
  %87 = vmatprep.subr.mxu0 0.0
  %88 = vmatpush1.msra.mxu0 0.0
  %89 = vmatprep.subr.mxu0 0.0
  %90 = vmatpush1.msra.mxu0 0.0
  %91 = vmatprep.subr.mxu0 0.0
  %92 = vmatpush1.msra.mxu0 0.0
  %93 = vmatprep.subr.mxu0 0.0
  %94 = vmatpush1.msra.mxu0 0.0
  %95 = vmatprep.subr.mxu0 0.0
  %96 = vmatpush1.msra.mxu0 0.0
  %97 = vmatprep.subr.mxu0 0.0
  %98 = vmatpush1.msra.mxu0 0.0
  %99 = vmatprep.subr.mxu0 0.0
  %100 = vmatpush1.msra.mxu0 0.0
  %101 = vmatprep.subr.mxu0 0.0
  %102 = vmatpush1.msra.mxu0 0.0
  %103 = vmatprep.subr.mxu0 0.0
  %104 = vmatpush1.msra.mxu0 0.0
  %105 = vmatprep.subr.mxu0 0.0
  %106 = vmatpush1.msra.mxu0 0.0
  %107 = vmatprep.subr.mxu0 0.0
  %108 = vmatpush1.msra.mxu0 0.0
  %109 = vmatprep.subr.mxu0 0.0
  %110 = vmatpush1.msra.mxu0 0.0
  %111 = vmatprep.subr.mxu0 0.0
  %112 = vmatpush1.msra.mxu0 0.0
  %113 = vmatprep.subr.mxu0 0.0
  %114 = vmatpush1.msra.mxu0 %v41
  %115 = vmatprep.subr.mxu0 0.0
  %116 = vmatpush2.msra.mxu0 0.0
  %117 = vmatprep.subr.mxu0 0.0
  %118 = vmatpush2.msra.mxu0 0.0
  %119 = vmatprep.subr.mxu0 0.0
  %120 = vmatpush2.msra.mxu0 0.0
  %121 = vmatprep.subr.mxu0 0.0
  %122 = vmatpush2.msra.mxu0 0.0
  %123 = vmatprep.subr.mxu0 0.0
  %124 = vmatpush2.msra.mxu0 0.0
  %125 = vmatprep.subr.mxu0 0.0
  %126 = vmatpush2.msra.mxu0 0.0
  %127 = vmatprep.subr.mxu0 0.0
  %128 = vmatpush2.msra.mxu0 0.0
  %129 = vmatprep.subr.mxu0 0.0
  %130 = vmatpush2.msra.mxu0 0.0
  %131 = vmatprep.subr.mxu0 0.0
  %132 = vmatpush2.msra.mxu0 0.0
  %133 = vmatprep.subr.mxu0 0.0
  %134 = vmatpush2.msra.mxu0 0.0
  %135 = vmatprep.subr.mxu0 0.0
  %136 = vmatpush2.msra.mxu0 0.0
  %137 = vmatprep.subr.mxu0 0.0
  %138 = vmatpush2.msra.mxu0 0.0
  %139 = vmatprep.subr.mxu0 0.0
  %140 = vmatpush2.msra.mxu0 0.0
  %141 = vmatprep.subr.mxu0 0.0
  %142 = vmatpush2.msra.mxu0 0.0
  %143 = vmatprep.subr.mxu0 0.0
  %144 = vmatpush2.msra.mxu0 0.0
  %145 = vmatprep.subr.mxu0 0.0
  %146 = vmatpush2.msra.mxu0 0.0
  %147 = vmatprep.mubr.f32.mxu0 0.0
  %148 = vmatmul.mubr.f32.gmra.mxu0 %v72
  %v149 = vpop.f32.mrf.mxu0
  %v150 = vadd.f32 %v53, %v149
  %v151 = vpop.f32.mrf.mxu0
  %152 = vmatprep.mubr.f32.mxu0 0.0
  %153 = vmatmul.mubr.f32.gmra.mxu0 %v75
  %v154 = vpop.f32.mrf.mxu0
  %v155 = vadd.f32 %v58, %v154
  %v156 = vpop.f32.mrf.mxu0
  %157 = vmatprep.mubr.f32.mxu0 0.0
  %158 = vmatmul.mubr.f32.gmra.mxu0 %v78
  %v159 = vpop.f32.mrf.mxu0
  %v160 = vadd.f32 %v63, %v159
  %v161 = vpop.f32.mrf.mxu0
  %162 = vmatprep.mubr.f32.mxu0 0.0
  %163 = vmatmul.mubr.f32.gmra.mxu0 %v81
  %v164 = vpop.f32.mrf.mxu0
  %v165 = vadd.f32 %v68, %v164
  %v166 = vpop.f32.mrf.mxu0
  %167 = vdwg.mxu0
  %v168 = vmax.f32 %v150, 0.0
  %v169 = vmax.f32 %v155, 0.0
  %v170 = vmax.f32 %v160, 0.0
  %v171 = vmax.f32 %v165, 0.0
  %v172 = vld [vmem:[%s4] sm:$0xff]
  %v173 = vld [vmem:[%s4 + $0x8] sm:$0xff]
  %v174 = vld [vmem:[%s4 + $0x10] sm:$0xff]
  %v175 = vld [vmem:[%s4 + $0x18] sm:$0xff]
  %v176 = vld [vmem:[%s5] sm:$0xff]
  %v177 = vld [vmem:[%s5 + $0x8] sm:$0xff]
  %v178 = vld [vmem:[%s5 + $0x10] sm:$0xff]
  %v179 = vld [vmem:[%s5 + $0x18] sm:$0xff]
  %181 = vset.pattern.permute.xlu0 0
  %182 = vperm.xlu0 %181, %v176
  %v183 = vpop.permute.xlu0 %182
  %186 = vset.pattern.permute.xlu0 0
  %187 = vperm.xlu0 %186, %v177
  %v188 = vpop.permute.xlu0 %187
  %191 = vset.pattern.permute.xlu0 0
  %192 = vperm.xlu0 %191, %v178
  %v193 = vpop.permute.xlu0 %192
  %196 = vset.pattern.permute.xlu0 0
  %197 = vperm.xlu0 %196, %v179
  %v198 = vpop.permute.xlu0 %197
  %vm200 = vcmask 261120
  %v202 = vsel %vm200, %v172, 0
  %v205 = vsel %vm200, %v173, 0
  %v208 = vsel %vm200, %v174, 0
  %v211 = vsel %vm200, %v175, 0
  %213 = vmatprep.subr.mxu0 0.0
  %214 = vmatpush1.msra.mxu0 0.0
  %215 = vmatprep.subr.mxu0 0.0
  %216 = vmatpush1.msra.mxu0 0.0
  %217 = vmatprep.subr.mxu0 0.0
  %218 = vmatpush1.msra.mxu0 0.0
  %219 = vmatprep.subr.mxu0 0.0
  %220 = vmatpush1.msra.mxu0 0.0
  %221 = vmatprep.subr.mxu0 0.0
  %222 = vmatpush1.msra.mxu0 0.0
  %223 = vmatprep.subr.mxu0 0.0
  %224 = vmatpush1.msra.mxu0 0.0
  %225 = vmatprep.subr.mxu0 0.0
  %226 = vmatpush1.msra.mxu0 0.0
  %227 = vmatprep.subr.mxu0 0.0
  %228 = vmatpush1.msra.mxu0 0.0
  %229 = vmatprep.subr.mxu0 0.0
  %230 = vmatpush1.msra.mxu0 0.0
  %231 = vmatprep.subr.mxu0 0.0
  %232 = vmatpush1.msra.mxu0 0.0
  %233 = vmatprep.subr.mxu0 0.0
  %234 = vmatpush1.msra.mxu0 0.0
  %235 = vmatprep.subr.mxu0 0.0
  %236 = vmatpush1.msra.mxu0 0.0
  %237 = vmatprep.subr.mxu0 0.0
  %238 = vmatpush1.msra.mxu0 %v171
  %239 = vmatprep.subr.mxu0 0.0
  %240 = vmatpush1.msra.mxu0 %v170
  %241 = vmatprep.subr.mxu0 0.0
  %242 = vmatpush1.msra.mxu0 %v169
  %243 = vmatprep.subr.mxu0 0.0
  %244 = vmatpush1.msra.mxu0 %v168
  %245 = vmatprep.subr.mxu0 0.0
  %246 = vmatpush2.msra.mxu0 0.0
  %247 = vmatprep.subr.mxu0 0.0
  %248 = vmatpush2.msra.mxu0 0.0
  %249 = vmatprep.subr.mxu0 0.0
  %250 = vmatpush2.msra.mxu0 0.0
  %251 = vmatprep.subr.mxu0 0.0
  %252 = vmatpush2.msra.mxu0 0.0
  %253 = vmatprep.subr.mxu0 0.0
  %254 = vmatpush2.msra.mxu0 0.0
  %255 = vmatprep.subr.mxu0 0.0
  %256 = vmatpush2.msra.mxu0 0.0
  %257 = vmatprep.subr.mxu0 0.0
  %258 = vmatpush2.msra.mxu0 0.0
  %259 = vmatprep.subr.mxu0 0.0
  %260 = vmatpush2.msra.mxu0 0.0
  %261 = vmatprep.subr.mxu0 0.0
  %262 = vmatpush2.msra.mxu0 0.0
  %263 = vmatprep.subr.mxu0 0.0
  %264 = vmatpush2.msra.mxu0 0.0
  %265 = vmatprep.subr.mxu0 0.0
  %266 = vmatpush2.msra.mxu0 0.0
  %267 = vmatprep.subr.mxu0 0.0
  %268 = vmatpush2.msra.mxu0 0.0
  %269 = vmatprep.subr.mxu0 0.0
  %270 = vmatpush2.msra.mxu0 0.0
  %271 = vmatprep.subr.mxu0 0.0
  %272 = vmatpush2.msra.mxu0 0.0
  %273 = vmatprep.subr.mxu0 0.0
  %274 = vmatpush2.msra.mxu0 0.0
  %275 = vmatprep.subr.mxu0 0.0
  %276 = vmatpush2.msra.mxu0 0.0
  %277 = vmatprep.mubr.f32.mxu0 0.0
  %278 = vmatmul.mubr.f32.gmra.mxu0 %v202
  %v279 = vpop.f32.mrf.mxu0
  %v280 = vadd.f32 %v183, %v279
  %v281 = vpop.f32.mrf.mxu0
  %282 = vmatprep.mubr.f32.mxu0 0.0
  %283 = vmatmul.mubr.f32.gmra.mxu0 %v205
  %v284 = vpop.f32.mrf.mxu0
  %v285 = vadd.f32 %v188, %v284
  %v286 = vpop.f32.mrf.mxu0
  %287 = vmatprep.mubr.f32.mxu0 0.0
  %288 = vmatmul.mubr.f32.gmra.mxu0 %v208
  %v289 = vpop.f32.mrf.mxu0
  %v290 = vadd.f32 %v193, %v289
  %v291 = vpop.f32.mrf.mxu0
  %292 = vmatprep.mubr.f32.mxu0 0.0
  %293 = vmatmul.mubr.f32.gmra.mxu0 %v211
  %v294 = vpop.f32.mrf.mxu0
  %v295 = vadd.f32 %v198, %v294
  %v296 = vpop.f32.mrf.mxu0
  %297 = vdwg.mxu0
  %v298 = vld [vmem:[%s1] sm:$0xff]
  %v299 = vld [vmem:[%s1 + $0x8] sm:$0xff]
  %v300 = vld [vmem:[%s1 + $0x10] sm:$0xff]
  %v301 = vld [vmem:[%s1 + $0x18] sm:$0xff]
  %v302 = vadd.f32 %v280, %v298
  %v303 = vadd.f32 %v285, %v299
  %v304 = vadd.f32 %v290, %v300
  %v305 = vadd.f32 %v295, %v301
  %v306 = vadd.f32 %v302, %v303
  %v307 = vadd.f32 %v306, %v304
  %v308 = vadd.f32 %v307, %v305
  %v309 = vrot.slane %v308, 4
  %v310 = vadd.f32 %v308, %v309
  %v311 = vrot.slane %v310, 2
  %v312 = vadd.f32 %v310, %v311
  %v313 = vrot.slane %v312, 1
  %v314 = vadd.f32 %v312, %v313
  %v315 = vrcp.pop 32.0
  %v316 = vmul.f32 %v314, %v315
  %v317 = vsub.f32 %v302, %v316
  %v318 = vsub.f32 %v303, %v316
  %v319 = vsub.f32 %v304, %v316
  %v320 = vsub.f32 %v305, %v316
  %v321 = vmul.f32 %v317, %v317
  %v322 = vmul.f32 %v318, %v318
  %v323 = vmul.f32 %v319, %v319
  %v324 = vmul.f32 %v320, %v320
  %v325 = vadd.f32 %v321, %v322
  %v326 = vadd.f32 %v325, %v323
  %v327 = vadd.f32 %v326, %v324
  %v328 = vrot.slane %v327, 4
  %v329 = vadd.f32 %v327, %v328
  %v330 = vrot.slane %v329, 2
  %v331 = vadd.f32 %v329, %v330
  %v332 = vrot.slane %v331, 1
  %v333 = vadd.f32 %v331, %v332
  %v334 = vmul.f32 %v333, %v315
  %v335 = vadd.f32 %v334, 1e-05
  %v336 = vrsqrt.pop %v335
  %v337 = vmul.f32 %v317, %v336
  %v338 = vmul.f32 %v318, %v336
  %v339 = vmul.f32 %v319, %v336
  %v340 = vmul.f32 %v320, %v336
  %v341 = vld [vmem:[%s6] sm:$0xff]
  %v342 = vld [vmem:[%s6 + $0x8] sm:$0xff]
  %v343 = vld [vmem:[%s6 + $0x10] sm:$0xff]
  %v344 = vld [vmem:[%s6 + $0x18] sm:$0xff]
  %346 = vset.pattern.permute.xlu0 0
  %347 = vperm.xlu0 %346, %v341
  %v348 = vpop.permute.xlu0 %347
  %351 = vset.pattern.permute.xlu0 0
  %352 = vperm.xlu0 %351, %v342
  %v353 = vpop.permute.xlu0 %352
  %356 = vset.pattern.permute.xlu0 0
  %357 = vperm.xlu0 %356, %v343
  %v358 = vpop.permute.xlu0 %357
  %361 = vset.pattern.permute.xlu0 0
  %362 = vperm.xlu0 %361, %v344
  %v363 = vpop.permute.xlu0 %362
  %v365 = vmul.f32 %v337, %v348
  %v366 = vmul.f32 %v338, %v353
  %v367 = vmul.f32 %v339, %v358
  %v368 = vmul.f32 %v340, %v363
  %v369 = vld [vmem:[%s7] sm:$0xff]
  %v370 = vld [vmem:[%s7 + $0x8] sm:$0xff]
  %v371 = vld [vmem:[%s7 + $0x10] sm:$0xff]
  %v372 = vld [vmem:[%s7 + $0x18] sm:$0xff]
  %374 = vset.pattern.permute.xlu0 0
  %375 = vperm.xlu0 %374, %v369
  %v376 = vpop.permute.xlu0 %375
  %379 = vset.pattern.permute.xlu0 0
  %380 = vperm.xlu0 %379, %v370
  %v381 = vpop.permute.xlu0 %380
  %384 = vset.pattern.permute.xlu0 0
  %385 = vperm.xlu0 %384, %v371
  %v386 = vpop.permute.xlu0 %385
  %389 = vset.pattern.permute.xlu0 0
  %390 = vperm.xlu0 %389, %v372
  %v391 = vpop.permute.xlu0 %390
  %v393 = vadd.f32 %v365, %v376
  %v394 = vadd.f32 %v366, %v381
  %v395 = vadd.f32 %v367, %v386
  %v396 = vadd.f32 %v368, %v391
  %v397 = vld [vmem:[%s8] sm:$0xff]
  %v398 = vld [vmem:[%s8 + $0x8] sm:$0xff]
  %v399 = vld [vmem:[%s8 + $0x10] sm:$0xff]
  %v400 = vld [vmem:[%s8 + $0x18] sm:$0xff]
  %v401 = vld [vmem:[%s9] sm:$0xff]
  %v402 = vld [vmem:[%s9 + $0x8] sm:$0xff]
  %v403 = vld [vmem:[%s9 + $0x10] sm:$0xff]
  %v404 = vld [vmem:[%s9 + $0x18] sm:$0xff]
  %406 = vset.pattern.permute.xlu0 0
  %407 = vperm.xlu0 %406, %v401
  %v408 = vpop.permute.xlu0 %407
  %411 = vset.pattern.permute.xlu0 0
  %412 = vperm.xlu0 %411, %v402
  %v413 = vpop.permute.xlu0 %412
  %416 = vset.pattern.permute.xlu0 0
  %417 = vperm.xlu0 %416, %v403
  %v418 = vpop.permute.xlu0 %417
  %421 = vset.pattern.permute.xlu0 0
  %422 = vperm.xlu0 %421, %v404
  %v423 = vpop.permute.xlu0 %422
  %v426 = vsel %vm200, %v397, 0
  %v429 = vsel %vm200, %v398, 0
  %v432 = vsel %vm200, %v399, 0
  %v435 = vsel %vm200, %v400, 0
  %437 = vmatprep.subr.mxu0 0.0
  %438 = vmatpush1.msra.mxu0 0.0
  %439 = vmatprep.subr.mxu0 0.0
  %440 = vmatpush1.msra.mxu0 0.0
  %441 = vmatprep.subr.mxu0 0.0
  %442 = vmatpush1.msra.mxu0 0.0
  %443 = vmatprep.subr.mxu0 0.0
  %444 = vmatpush1.msra.mxu0 0.0
  %445 = vmatprep.subr.mxu0 0.0
  %446 = vmatpush1.msra.mxu0 0.0
  %447 = vmatprep.subr.mxu0 0.0
  %448 = vmatpush1.msra.mxu0 0.0
  %449 = vmatprep.subr.mxu0 0.0
  %450 = vmatpush1.msra.mxu0 0.0
  %451 = vmatprep.subr.mxu0 0.0
  %452 = vmatpush1.msra.mxu0 0.0
  %453 = vmatprep.subr.mxu0 0.0
  %454 = vmatpush1.msra.mxu0 0.0
  %455 = vmatprep.subr.mxu0 0.0
  %456 = vmatpush1.msra.mxu0 0.0
  %457 = vmatprep.subr.mxu0 0.0
  %458 = vmatpush1.msra.mxu0 0.0
  %459 = vmatprep.subr.mxu0 0.0
  %460 = vmatpush1.msra.mxu0 0.0
  %461 = vmatprep.subr.mxu0 0.0
  %462 = vmatpush1.msra.mxu0 %v396
  %463 = vmatprep.subr.mxu0 0.0
  %464 = vmatpush1.msra.mxu0 %v395
  %465 = vmatprep.subr.mxu0 0.0
  %466 = vmatpush1.msra.mxu0 %v394
  %467 = vmatprep.subr.mxu0 0.0
  %468 = vmatpush1.msra.mxu0 %v393
  %469 = vmatprep.subr.mxu0 0.0
  %470 = vmatpush2.msra.mxu0 0.0
  %471 = vmatprep.subr.mxu0 0.0
  %472 = vmatpush2.msra.mxu0 0.0
  %473 = vmatprep.subr.mxu0 0.0
  %474 = vmatpush2.msra.mxu0 0.0
  %475 = vmatprep.subr.mxu0 0.0
  %476 = vmatpush2.msra.mxu0 0.0
  %477 = vmatprep.subr.mxu0 0.0
  %478 = vmatpush2.msra.mxu0 0.0
  %479 = vmatprep.subr.mxu0 0.0
  %480 = vmatpush2.msra.mxu0 0.0
  %481 = vmatprep.subr.mxu0 0.0
  %482 = vmatpush2.msra.mxu0 0.0
  %483 = vmatprep.subr.mxu0 0.0
  %484 = vmatpush2.msra.mxu0 0.0
  %485 = vmatprep.subr.mxu0 0.0
  %486 = vmatpush2.msra.mxu0 0.0
  %487 = vmatprep.subr.mxu0 0.0
  %488 = vmatpush2.msra.mxu0 0.0
  %489 = vmatprep.subr.mxu0 0.0
  %490 = vmatpush2.msra.mxu0 0.0
  %491 = vmatprep.subr.mxu0 0.0
  %492 = vmatpush2.msra.mxu0 0.0
  %493 = vmatprep.subr.mxu0 0.0
  %494 = vmatpush2.msra.mxu0 0.0
  %495 = vmatprep.subr.mxu0 0.0
  %496 = vmatpush2.msra.mxu0 0.0
  %497 = vmatprep.subr.mxu0 0.0
  %498 = vmatpush2.msra.mxu0 0.0
  %499 = vmatprep.subr.mxu0 0.0
  %500 = vmatpush2.msra.mxu0 0.0
  %501 = vmatprep.mubr.f32.mxu0 0.0
  %502 = vmatmul.mubr.f32.gmra.mxu0 %v426
  %v503 = vpop.f32.mrf.mxu0
  %v504 = vadd.f32 %v408, %v503
  %v505 = vpop.f32.mrf.mxu0
  %506 = vmatprep.mubr.f32.mxu0 0.0
  %507 = vmatmul.mubr.f32.gmra.mxu0 %v429
  %v508 = vpop.f32.mrf.mxu0
  %v509 = vadd.f32 %v413, %v508
  %v510 = vpop.f32.mrf.mxu0
  %511 = vmatprep.mubr.f32.mxu0 0.0
  %512 = vmatmul.mubr.f32.gmra.mxu0 %v432
  %v513 = vpop.f32.mrf.mxu0
  %v514 = vadd.f32 %v418, %v513
  %v515 = vpop.f32.mrf.mxu0
  %516 = vmatprep.mubr.f32.mxu0 0.0
  %517 = vmatmul.mubr.f32.gmra.mxu0 %v435
  %v518 = vpop.f32.mrf.mxu0
  %v519 = vadd.f32 %v423, %v518
  %v520 = vpop.f32.mrf.mxu0
  %521 = vdwg.mxu0
  %v522 = vmax.f32 %v504, 0.0
  %v523 = vmax.f32 %v509, 0.0
  %v524 = vmax.f32 %v514, 0.0
  %v525 = vmax.f32 %v519, 0.0
  %v526 = vld [vmem:[%s10] sm:$0xff]
  %v527 = vld [vmem:[%s11] sm:$0xff]
  %529 = vset.pattern.permute.xlu0 0
  %530 = vperm.xlu0 %529, %v527
  %v531 = vpop.permute.xlu0 %530
  %v534 = vsel %vm200, %v526, 0
  %536 = vmatprep.subr.mxu0 0.0
  %537 = vmatpush1.msra.mxu0 0.0
  %538 = vmatprep.subr.mxu0 0.0
  %539 = vmatpush1.msra.mxu0 0.0
  %540 = vmatprep.subr.mxu0 0.0
  %541 = vmatpush1.msra.mxu0 0.0
  %542 = vmatprep.subr.mxu0 0.0
  %543 = vmatpush1.msra.mxu0 0.0
  %544 = vmatprep.subr.mxu0 0.0
  %545 = vmatpush1.msra.mxu0 0.0
  %546 = vmatprep.subr.mxu0 0.0
  %547 = vmatpush1.msra.mxu0 0.0
  %548 = vmatprep.subr.mxu0 0.0
  %549 = vmatpush1.msra.mxu0 0.0
  %550 = vmatprep.subr.mxu0 0.0
  %551 = vmatpush1.msra.mxu0 0.0
  %552 = vmatprep.subr.mxu0 0.0
  %553 = vmatpush1.msra.mxu0 0.0
  %554 = vmatprep.subr.mxu0 0.0
  %555 = vmatpush1.msra.mxu0 0.0
  %556 = vmatprep.subr.mxu0 0.0
  %557 = vmatpush1.msra.mxu0 0.0
  %558 = vmatprep.subr.mxu0 0.0
  %559 = vmatpush1.msra.mxu0 0.0
  %560 = vmatprep.subr.mxu0 0.0
  %561 = vmatpush1.msra.mxu0 %v525
  %562 = vmatprep.subr.mxu0 0.0
  %563 = vmatpush1.msra.mxu0 %v524
  %564 = vmatprep.subr.mxu0 0.0
  %565 = vmatpush1.msra.mxu0 %v523
  %566 = vmatprep.subr.mxu0 0.0
  %567 = vmatpush1.msra.mxu0 %v522
  %568 = vmatprep.subr.mxu0 0.0
  %569 = vmatpush2.msra.mxu0 0.0
  %570 = vmatprep.subr.mxu0 0.0
  %571 = vmatpush2.msra.mxu0 0.0
  %572 = vmatprep.subr.mxu0 0.0
  %573 = vmatpush2.msra.mxu0 0.0
  %574 = vmatprep.subr.mxu0 0.0
  %575 = vmatpush2.msra.mxu0 0.0
  %576 = vmatprep.subr.mxu0 0.0
  %577 = vmatpush2.msra.mxu0 0.0
  %578 = vmatprep.subr.mxu0 0.0
  %579 = vmatpush2.msra.mxu0 0.0
  %580 = vmatprep.subr.mxu0 0.0
  %581 = vmatpush2.msra.mxu0 0.0
  %582 = vmatprep.subr.mxu0 0.0
  %583 = vmatpush2.msra.mxu0 0.0
  %584 = vmatprep.subr.mxu0 0.0
  %585 = vmatpush2.msra.mxu0 0.0
  %586 = vmatprep.subr.mxu0 0.0
  %587 = vmatpush2.msra.mxu0 0.0
  %588 = vmatprep.subr.mxu0 0.0
  %589 = vmatpush2.msra.mxu0 0.0
  %590 = vmatprep.subr.mxu0 0.0
  %591 = vmatpush2.msra.mxu0 0.0
  %592 = vmatprep.subr.mxu0 0.0
  %593 = vmatpush2.msra.mxu0 0.0
  %594 = vmatprep.subr.mxu0 0.0
  %595 = vmatpush2.msra.mxu0 0.0
  %596 = vmatprep.subr.mxu0 0.0
  %597 = vmatpush2.msra.mxu0 0.0
  %598 = vmatprep.subr.mxu0 0.0
  %599 = vmatpush2.msra.mxu0 0.0
  %600 = vmatprep.mubr.f32.mxu0 0.0
  %601 = vmatmul.mubr.f32.gmra.mxu0 %v534
  %v602 = vpop.f32.mrf.mxu0
  %v603 = vadd.f32 %v531, %v602
  %v604 = vpop.f32.mrf.mxu0
  %605 = vdwg.mxu0
  %606 = vst [vmem:[%s12] sm:$0xff] %v603
  // Predicated region
  $region50: #{denoiser_forward.1} parent=0 // pred_check
    _
  $region51: #{denoiser_forward.1} parent=0 // pred_check_branch
    %608 = sbr.rel (0) target = $region53
  $region52: #{denoiser_forward.1} parent=0 // pred_region
    _
  $region53: #{denoiser_forward.1} parent=0 // pred_fallthru
    _
  // Predicated region
  $region54: #{denoiser_forward.1} parent=0 // pred_check
    _
  $region55: #{denoiser_forward.1} parent=0 // pred_check_branch
    %610 = sbr.rel (0) target = $region57
  $region56: #{denoiser_forward.1} parent=0 // pred_region
    _
  $region57: #{denoiser_forward.1} parent=0 // pred_fallthru
    _

</llo_original>
